<compile_context>
chip_gen: v6e
topology: v6e:2x2x1
jax: 0.10.0
libtpu: 0.0.40
codegen_flags: <defaults>
</compile_context>

<pallas_src>
import jax
import jax.numpy as jnp
from jax.experimental import pallas as pl
from jax.experimental.pallas import tpu as pltpu


def _round_up(x: int, m: int) -> int:
    return (x + m - 1) // m * m


def mlp_kernel(x_ref, w1_ref, b1_ref, w2_ref, b2_ref, o_ref):
    # Hidden layer: (TB, K)bf16 @ (K, H)bf16 -> f32 acc, + bias, ReLU.
    h = jnp.dot(x_ref[...], w1_ref[...], preferred_element_type=jnp.float32)
    h = jnp.maximum(h + b1_ref[...], 0.0)
    # Output layer: (TB, H)bf16 @ (H, N)bf16 -> f32 acc, + bias.
    out = jnp.dot(h.astype(jnp.bfloat16), w2_ref[...],
                  preferred_element_type=jnp.float32)
    o_ref[...] = (out + b2_ref[...]).astype(o_ref.dtype)


def mnist_model_forward(xb, w1, b1, w2, b2, *, batch_tile: int = 256):
    """xb: (B, C, H, W) float32 NCHW.  Returns logits (B, out_size) float32."""
    B = xb.shape[0]
    x = xb.reshape(B, -1).astype(jnp.float32)      # == xb.view(xb.size(0), -1)
    in_size = x.shape[1]
    hidden_size = w1.shape[1]
    out_size = w2.shape[1]

    # Lane/sublane-aligned padded sizes.
    K = _round_up(in_size, 128)        # contraction dim of first matmul
    H = _round_up(hidden_size, 128)    # hidden lanes / second contraction dim
    N = _round_up(out_size, 128)       # output lanes (unmasked vst)
    TB = min(batch_tile, _round_up(B, 16))   # bf16 sublane-aligned batch tile
    Bp = _round_up(B, TB)

    # Zero-pad (padded weight cols / bias lanes MUST be zero so padded hidden
    # lanes are exactly 0 after ReLU and padded logits carry no garbage).
    xp = jnp.zeros((Bp, K), jnp.bfloat16).at[:B, :in_size].set(
        x.astype(jnp.bfloat16))
    w1p = jnp.zeros((K, H), jnp.bfloat16).at[:in_size, :hidden_size].set(
        w1.astype(jnp.bfloat16))
    b1p = jnp.zeros((1, H), jnp.float32).at[:, :hidden_size].set(b1)
    w2p = jnp.zeros((H, N), jnp.bfloat16).at[:hidden_size, :out_size].set(
        w2.astype(jnp.bfloat16))
    b2p = jnp.zeros((1, N), jnp.float32).at[:, :out_size].set(b2)

    grid = (Bp // TB,)
    cost = pl.CostEstimate(
        flops=2 * Bp * (K * H + H * N),
        transcendentals=0,
        bytes_accessed=(xp.size + w1p.size + w2p.size) * 2
        + (b1p.size + b2p.size) * 4 + Bp * N * 4,
    )

    out_padded = pl.pallas_call(
        mlp_kernel,
        out_shape=jax.ShapeDtypeStruct((Bp, N), jnp.float32),
        grid_spec=pltpu.PrefetchScalarGridSpec(
            num_scalar_prefetch=0,
            grid=grid,
            in_specs=[
                pl.BlockSpec((TB, K), lambda i: (i, 0)),   # x tile: streams
                pl.BlockSpec((K, H), lambda i: (0, 0)),    # W1: resident
                pl.BlockSpec((1, H), lambda i: (0, 0)),    # b1: resident
                pl.BlockSpec((H, N), lambda i: (0, 0)),    # W2: resident
                pl.BlockSpec((1, N), lambda i: (0, 0)),    # b2: resident
            ],
            out_specs=pl.BlockSpec((TB, N), lambda i: (i, 0)),
        ),
        compiler_params=pltpu.CompilerParams(
            dimension_semantics=("parallel",),   # shards batch tiles across TCs
        ),
        cost_estimate=cost,
    )(xp, w1p, b1p, w2p, b2p)

    return out_padded[:B, :out_size]


def init_params(key, in_size, hidden_size, out_size):
    """Deterministic init mimicking nn.Linear's U(-1/sqrt(fan_in), 1/sqrt(fan_in)).
    Weights stored as (in, out) = transpose of PyTorch's (out, in)."""
    k1, k2, k3, k4 = jax.random.split(key, 4)
    bound1 = 1.0 / jnp.sqrt(in_size)
    bound2 = 1.0 / jnp.sqrt(hidden_size)
    w1 = jax.random.uniform(k1, (in_size, hidden_size), jnp.float32, -bound1, bound1)
    b1 = jax.random.uniform(k2, (1, hidden_size), jnp.float32, -bound1, bound1)
    w2 = jax.random.uniform(k3, (hidden_size, out_size), jnp.float32, -bound2, bound2)
    b2 = jax.random.uniform(k4, (1, out_size), jnp.float32, -bound2, bound2)
    return w1, b1, w2, b2


if __name__ == "__main__":
    # Small shapes consistent with the module: B=2, single-channel 16x16 images,
    # in_size = 1*16*16 = 256, hidden=32, out=10 classes.
    B, C, Hh, Ww = 2, 1, 16, 16
    in_size, hidden_size, out_size = C * Hh * Ww, 32, 10

    key = jax.random.PRNGKey(0)
    k_x, k_p = jax.random.split(key)
    xb = jax.random.normal(k_x, (B, C, Hh, Ww), jnp.float32)
    w1, b1, w2, b2 = init_params(k_p, in_size, hidden_size, out_size)

    logits = mnist_model_forward(xb, w1, b1, w2, b2)
    jax.block_until_ready(logits)
    assert logits.shape == (B, out_size)

    # Reference mirroring the kernel's bf16-operand / f32-accumulate matmuls.
    x_flat = xb.reshape(B, -1)
    x_bf = x_flat.astype(jnp.bfloat16).astype(jnp.float32)
    w1_bf = w1.astype(jnp.bfloat16).astype(jnp.float32)
    w2_bf = w2.astype(jnp.bfloat16).astype(jnp.float32)
    h_ref = jnp.maximum(x_bf @ w1_bf + b1, 0.0)
    ref = h_ref.astype(jnp.bfloat16).astype(jnp.float32) @ w2_bf + b2
    assert jnp.allclose(logits, ref, atol=5e-2, rtol=5e-2), (
        jnp.max(jnp.abs(logits - ref)))

    # Loose check against the pure-f32 math too (bf16 quantization error only).
    ref_f32 = jnp.maximum(x_flat @ w1 + b1, 0.0) @ w2 + b2
    assert jnp.allclose(logits, ref_f32, atol=1e-1, rtol=1e-1)

    print("KERNEL_OK")
</pallas_src>

<mosaic_0001>
module attributes {stable_mosaic.version = 11 : i64} {
  func.func @mlp_kernel(%arg0: i32, %arg1: memref<16x256xbf16, #tpu.memory_space<vmem>>, %arg2: memref<256x128xbf16, #tpu.memory_space<vmem>>, %arg3: memref<1x128xf32, #tpu.memory_space<vmem>>, %arg4: memref<128x128xbf16, #tpu.memory_space<vmem>>, %arg5: memref<1x128xf32, #tpu.memory_space<vmem>>, %arg6: memref<16x128xf32, #tpu.memory_space<vmem>>) attributes {dimension_semantics = [#tpu.dimension_semantics<parallel>], iteration_bounds = array<i64: 1>, scalar_prefetch = 0 : i64, scratch_operands = 0 : i64, tpu.core_type = #tpu.core_type<tc>, window_params = [{transform_indices = @transform_0, window_bounds = array<i64: 16, 256>}, {pipeline_mode = #tpu.pipeline_mode<synchronous>, transform_indices = @transform_1, window_bounds = array<i64: 256, 128>}, {pipeline_mode = #tpu.pipeline_mode<synchronous>, transform_indices = @transform_2, window_bounds = array<i64: 1, 128>}, {pipeline_mode = #tpu.pipeline_mode<synchronous>, transform_indices = @transform_3, window_bounds = array<i64: 128, 128>}, {pipeline_mode = #tpu.pipeline_mode<synchronous>, transform_indices = @transform_4, window_bounds = array<i64: 1, 128>}, {transform_indices = @transform_5, window_bounds = array<i64: 16, 128>}]} {
    %c0 = arith.constant 0 : index
    %c0_0 = arith.constant 0 : index
    %0 = vector.load %arg1[%c0, %c0_0] : memref<16x256xbf16, #tpu.memory_space<vmem>>, vector<16x256xbf16>
    %c0_1 = arith.constant 0 : index
    %c0_2 = arith.constant 0 : index
    %1 = vector.load %arg2[%c0_1, %c0_2] : memref<256x128xbf16, #tpu.memory_space<vmem>>, vector<256x128xbf16>
    %cst = arith.constant dense<0.000000e+00> : vector<16x128xf32>
    %2 = tpu.matmul %0, %1, %cst {dimension_numbers = #tpu.dot_dimension_numbers<[1], [0], [0], [1], [0, 0, 1, 1], [], []>} : vector<16x256xbf16>, vector<256x128xbf16>, vector<16x128xf32> -> vector<16x128xf32>
    %c0_3 = arith.constant 0 : index
    %c0_4 = arith.constant 0 : index
    %3 = vector.load %arg3[%c0_3, %c0_4] : memref<1x128xf32, #tpu.memory_space<vmem>>, vector<1x128xf32>
    %4 = vector.broadcast %3 : vector<1x128xf32> to vector<16x128xf32>
    %5 = arith.addf %2, %4 : vector<16x128xf32>
    %cst_5 = arith.constant 0.000000e+00 : f32
    %6 = vector.broadcast %cst_5 : f32 to vector<16x128xf32>
    %7 = arith.maximumf %5, %6 : vector<16x128xf32>
    %8 = arith.truncf %7 : vector<16x128xf32> to vector<16x128xbf16>
    %c0_6 = arith.constant 0 : index
    %c0_7 = arith.constant 0 : index
    %9 = vector.load %arg4[%c0_6, %c0_7] : memref<128x128xbf16, #tpu.memory_space<vmem>>, vector<128x128xbf16>
    %cst_8 = arith.constant dense<0.000000e+00> : vector<16x128xf32>
    %10 = tpu.matmul %8, %9, %cst_8 {dimension_numbers = #tpu.dot_dimension_numbers<[1], [0], [0], [1], [0, 0, 1, 1], [], []>} : vector<16x128xbf16>, vector<128x128xbf16>, vector<16x128xf32> -> vector<16x128xf32>
    %c0_9 = arith.constant 0 : index
    %c0_10 = arith.constant 0 : index
    %11 = vector.load %arg5[%c0_9, %c0_10] : memref<1x128xf32, #tpu.memory_space<vmem>>, vector<1x128xf32>
    %12 = vector.broadcast %11 : vector<1x128xf32> to vector<16x128xf32>
    %13 = arith.addf %10, %12 : vector<16x128xf32>
    %c0_11 = arith.constant 0 : index
    %c0_12 = arith.constant 0 : index
    %14 = vector.load %arg6[%c0_11, %c0_12] : memref<16x128xf32, #tpu.memory_space<vmem>>, vector<16x128xf32>
    tpu.vector_store %arg6[%c0_11, %c0_12], %13 {strides = array<i32>} : memref<16x128xf32, #tpu.memory_space<vmem>>, vector<16x128xf32>,
    return
  }
  func.func @transform_0(%arg0: i32) -> (i32, i32) {
    %c0_i32 = arith.constant 0 : i32
    %c0_i32_0 = arith.constant 0 : i32
    return %arg0, %c0_i32 : i32, i32
  }
  func.func @transform_1(%arg0: i32) -> (i32, i32) {
    %c0_i32 = arith.constant 0 : i32
    %c0_i32_0 = arith.constant 0 : i32
    %c0_i32_1 = arith.constant 0 : i32
    return %c0_i32, %c0_i32_0 : i32, i32
  }
  func.func @transform_2(%arg0: i32) -> (i32, i32) {
    %c0_i32 = arith.constant 0 : i32
    %c0_i32_0 = arith.constant 0 : i32
    %c0_i32_1 = arith.constant 0 : i32
    return %c0_i32, %c0_i32_0 : i32, i32
  }
  func.func @transform_3(%arg0: i32) -> (i32, i32) {
    %c0_i32 = arith.constant 0 : i32
    %c0_i32_0 = arith.constant 0 : i32
    %c0_i32_1 = arith.constant 0 : i32
    return %c0_i32, %c0_i32_0 : i32, i32
  }
  func.func @transform_4(%arg0: i32) -> (i32, i32) {
    %c0_i32 = arith.constant 0 : i32
    %c0_i32_0 = arith.constant 0 : i32
    %c0_i32_1 = arith.constant 0 : i32
    return %c0_i32, %c0_i32_0 : i32, i32
  }
  func.func @transform_5(%arg0: i32) -> (i32, i32) {
    %c0_i32 = arith.constant 0 : i32
    %c0_i32_0 = arith.constant 0 : i32
    return %arg0, %c0_i32 : i32, i32
  }
}

</mosaic_0001>

<llo_original>
// kernel: tpu_custom_call.1
$region0: #{tpu_custom_call.1}
  #allocation0 [shape = 'u32[]', space=smem, size = 0x4, offset = 0x4, fixed_abs, tag = 'smem constant byte address 0x4 - core index']
  #allocation1 [shape = 'u32[144,128]{1,0:T(1,128)}', space=vmem, size = 0x12000, scoped, tag = 'internal scratch']
  %s0 = inlined_call_operand.hbm [shape: bf16[16,256], index: 0, kind: input, shape index: {}]
  %s1 = inlined_call_operand.hbm [shape: bf16[256,128], index: 1, kind: input, shape index: {}]
  %s2 = inlined_call_operand.vmem [shape: f32[1,128], index: 2, kind: input, shape index: {}]
  %s3 = inlined_call_operand.hbm [shape: bf16[128,128], index: 3, kind: input, shape index: {}]
  %s4 = inlined_call_operand.vmem [shape: f32[1,128], index: 4, kind: input, shape index: {}]
  %s5 = inlined_call_operand.hbm [shape: f32[16,128], index: 5, kind: output, shape index: {}]
  %s6 = sld [smem:[#allocation0]]
  $region42: #{tpu_custom_call.1} parent=0
    _
  %s8 = ssub.s32 1, %s6
  %s9 = scalar_select 0, %s8, %s6
  $region1: #{tpu_custom_call.1} parent=0
    #allocation2 [shape = 'u8[8192]{0}', space=vmem, size = 0x2000, scoped, tag = 'input window, operand 0, single buffered']
    #allocation3 [shape = 's32[1]{0}', space=sflag, size = 0x4, scoped, tag = 'scoped memory for tpu_custom_call.1']
    #allocation4 [shape = 's32[1]{0}', space=sflag, size = 0x4, scoped, tag = 'scoped memory for tpu_custom_call.1']
    #allocation5 [shape = 'u8[65536]{0}', space=vmem, size = 0x10000, scoped, tag = 'input window, operand 1, single buffered']
    #allocation6 [shape = 's32[1]{0}', space=sflag, size = 0x4, scoped, tag = 'scoped memory for tpu_custom_call.1']
    #allocation7 [shape = 'u8[32768]{0}', space=vmem, size = 0x8000, scoped, tag = 'input window, operand 3, single buffered']
    #allocation8 [shape = 'u8[8192]{0}', space=vmem, size = 0x2000, scoped, tag = 'output window, operand 0, single buffered']
    %10 = vsyncpa [#allocation3], 0
    %11 = vsyncpa [#allocation6], 0
    %12 = vsyncpa [#allocation4], 0
    // Predicated region
    $region2: #{tpu_custom_call.1} parent=1 // pred_check
      _
    $region3: #{tpu_custom_call.1} parent=1 // pred_check_branch
      %14 = sbr.rel (0) target = $region5
    $region4: #{tpu_custom_call.1} parent=1 // pred_region
      %s16 = ssub.s32 256, 256
      %17 = vsyncadd [#allocation3], %s16
      %s18 = sshll.u32 [#allocation2], 4
      %s19 = int_to_ptr.vmem [resolvable:$true] %s18
      %24 = dma.hbm_to_vmem [thread:$0]  %s0, 256, %s19, [#allocation3], 128, 128, 8
    $region5: #{tpu_custom_call.1} parent=1 // pred_fallthru
      _
    // Predicated region
    $region6: #{tpu_custom_call.1} parent=1 // pred_check
      _
    $region7: #{tpu_custom_call.1} parent=1 // pred_check_branch
      %26 = sbr.rel (0) target = $region9
    $region8: #{tpu_custom_call.1} parent=1 // pred_region
      %s28 = ssub.s32 2048, 2048
      %29 = vsyncadd [#allocation6], %s28
      %s30 = sshll.u32 [#allocation5], 4
      %s31 = int_to_ptr.vmem [resolvable:$true] %s30
      %36 = dma.hbm_to_vmem [thread:$0]  %s1, 2048, %s31, [#allocation6], 64, 64, 4
    $region9: #{tpu_custom_call.1} parent=1 // pred_fallthru
      _
    // Predicated region
    $region10: #{tpu_custom_call.1} parent=1 // pred_check
      _
    $region11: #{tpu_custom_call.1} parent=1 // pred_check_branch
      %38 = sbr.rel (0) target = $region13
    $region12: #{tpu_custom_call.1} parent=1 // pred_region
      _
    $region13: #{tpu_custom_call.1} parent=1 // pred_fallthru
      _
    // Predicated region
    $region14: #{tpu_custom_call.1} parent=1 // pred_check
      _
    $region15: #{tpu_custom_call.1} parent=1 // pred_check_branch
      %40 = sbr.rel (0) target = $region17
    $region16: #{tpu_custom_call.1} parent=1 // pred_region
      %s42 = ssub.s32 1024, 1024
      %43 = vsyncadd [#allocation6], %s42
      %s44 = sshll.u32 [#allocation7], 4
      %s45 = int_to_ptr.vmem [resolvable:$true] %s44
      %50 = dma.hbm_to_vmem [thread:$0]  %s3, 1024, %s45, [#allocation6], 64, 64, 4
    $region17: #{tpu_custom_call.1} parent=1 // pred_fallthru
      _
    // Predicated region
    $region18: #{tpu_custom_call.1} parent=1 // pred_check
      _
    $region19: #{tpu_custom_call.1} parent=1 // pred_check_branch
      %52 = sbr.rel (0) target = $region21
    $region20: #{tpu_custom_call.1} parent=1 // pred_region
      _
    $region21: #{tpu_custom_call.1} parent=1 // pred_fallthru
      _
    // Predicated region
    $region22: #{tpu_custom_call.1} parent=1 // pred_check
      _
    $region23: #{tpu_custom_call.1} parent=1 // pred_check_branch
      %54 = sbr.rel (0) target = $region25
    $region24: #{tpu_custom_call.1} parent=1 // pred_region
      %55 = dma.done [#allocation3], 256
    $region25: #{tpu_custom_call.1} parent=1 // pred_fallthru
      _
    // Predicated region
    $region26: #{tpu_custom_call.1} parent=1 // pred_check
      _
    $region27: #{tpu_custom_call.1} parent=1 // pred_check_branch
      %57 = sbr.rel (0) target = $region29
    $region28: #{tpu_custom_call.1} parent=1 // pred_region
      %58 = dma.done [#allocation6], 2048
    $region29: #{tpu_custom_call.1} parent=1 // pred_fallthru
      _
    // Predicated region
    $region30: #{tpu_custom_call.1} parent=1 // pred_check
      _
    $region31: #{tpu_custom_call.1} parent=1 // pred_check_branch
      %60 = sbr.rel (0) target = $region33
    $region32: #{tpu_custom_call.1} parent=1 // pred_region
      %61 = dma.done [#allocation6], 1024
    $region33: #{tpu_custom_call.1} parent=1 // pred_fallthru
      _
    %v63 = vld [vmem:[#allocation2] sm:$0xff]
    %v64 = vld [vmem:[#allocation2 + $0x8] sm:$0xff]
    %v65 = vld [vmem:[#allocation5] sm:$0xf]
    %v66 = vld [vmem:[#allocation5 + $0x4] sm:$0xf]
    %v67 = vld [vmem:[#allocation5 + $0x8] sm:$0xf]
    %v68 = vld [vmem:[#allocation5 + $0xc] sm:$0xf]
    %v69 = vld [vmem:[#allocation5 + $0x10] sm:$0xf]
    %v70 = vld [vmem:[#allocation5 + $0x14] sm:$0xf]
    %v71 = vld [vmem:[#allocation5 + $0x18] sm:$0xf]
    %v72 = vld [vmem:[#allocation5 + $0x1c] sm:$0xf]
    %v73 = vld [vmem:[#allocation5 + $0x20] sm:$0xf]
    %v74 = vld [vmem:[#allocation5 + $0x24] sm:$0xf]
    %v75 = vld [vmem:[#allocation5 + $0x28] sm:$0xf]
    %v76 = vld [vmem:[#allocation5 + $0x2c] sm:$0xf]
    %v77 = vld [vmem:[#allocation5 + $0x30] sm:$0xf]
    %v78 = vld [vmem:[#allocation5 + $0x34] sm:$0xf]
    %v79 = vld [vmem:[#allocation5 + $0x38] sm:$0xf]
    %v80 = vld [vmem:[#allocation5 + $0x3c] sm:$0xf]
    %v81 = vld [vmem:[#allocation5 + $0x40] sm:$0xf]
    %v82 = vld [vmem:[#allocation5 + $0x44] sm:$0xf]
    %v83 = vld [vmem:[#allocation5 + $0x48] sm:$0xf]
    %v84 = vld [vmem:[#allocation5 + $0x4c] sm:$0xf]
    %v85 = vld [vmem:[#allocation5 + $0x50] sm:$0xf]
    %v86 = vld [vmem:[#allocation5 + $0x54] sm:$0xf]
    %v87 = vld [vmem:[#allocation5 + $0x58] sm:$0xf]
    %v88 = vld [vmem:[#allocation5 + $0x5c] sm:$0xf]
    %v89 = vld [vmem:[#allocation5 + $0x60] sm:$0xf]
    %v90 = vld [vmem:[#allocation5 + $0x64] sm:$0xf]
    %v91 = vld [vmem:[#allocation5 + $0x68] sm:$0xf]
    %v92 = vld [vmem:[#allocation5 + $0x6c] sm:$0xf]
    %v93 = vld [vmem:[#allocation5 + $0x70] sm:$0xf]
    %v94 = vld [vmem:[#allocation5 + $0x74] sm:$0xf]
    %v95 = vld [vmem:[#allocation5 + $0x78] sm:$0xf]
    %v96 = vld [vmem:[#allocation5 + $0x7c] sm:$0xf]
    %v97 = vld [vmem:[%s2] sm:$0x1]
    %v99 = vlaneseq
    %v100 = vshrl.u32 %v99, 7
    %v101 = vsub.s32 0, %v100
    %v102 = vrot.slane %v97, %v101
    %v106 = vunpack.c.l.b16 %v63
    %v107 = vunpack.c.h.b16 %v63
    %v108 = vunpack.c.l.b16 %v64
    %v109 = vunpack.c.h.b16 %v64
    %v110 = vpack.c.b16 %v108, %v106
    %v111 = vpack.c.b16 %v109, %v107
    %v146 = vunpack.c.l.b16 %v65
    %v147 = vunpack.c.l.b16 %v66
    %v148 = vunpack.c.l.b16 %v67
    %v149 = vunpack.c.l.b16 %v68
    %v150 = vunpack.c.l.b16 %v69
    %v151 = vunpack.c.l.b16 %v70
    %v152 = vunpack.c.l.b16 %v71
    %v153 = vunpack.c.l.b16 %v72
    %v154 = vunpack.c.l.b16 %v73
    %v155 = vunpack.c.l.b16 %v74
    %v156 = vunpack.c.l.b16 %v75
    %v157 = vunpack.c.l.b16 %v76
    %v158 = vunpack.c.l.b16 %v77
    %v159 = vunpack.c.l.b16 %v78
    %v160 = vunpack.c.l.b16 %v79
    %v161 = vunpack.c.l.b16 %v80
    %v162 = vunpack.c.l.b16 %v81
    %v163 = vunpack.c.l.b16 %v82
    %v164 = vunpack.c.l.b16 %v83
    %v165 = vunpack.c.l.b16 %v84
    %v166 = vunpack.c.l.b16 %v85
    %v167 = vunpack.c.l.b16 %v86
    %v168 = vunpack.c.l.b16 %v87
    %v169 = vunpack.c.l.b16 %v88
    %v170 = vunpack.c.l.b16 %v89
    %v171 = vunpack.c.l.b16 %v90
    %v172 = vunpack.c.l.b16 %v91
    %v173 = vunpack.c.l.b16 %v92
    %v174 = vunpack.c.l.b16 %v93
    %v175 = vunpack.c.l.b16 %v94
    %v176 = vunpack.c.l.b16 %v95
    %v177 = vunpack.c.l.b16 %v96
    %v178 = vpack.c.b16 %v147, %v146
    %v179 = vpack.c.b16 %v149, %v148
    %v180 = vpack.c.b16 %v151, %v150
    %v181 = vpack.c.b16 %v153, %v152
    %v182 = vpack.c.b16 %v155, %v154
    %v183 = vpack.c.b16 %v157, %v156
    %v184 = vpack.c.b16 %v159, %v158
    %v185 = vpack.c.b16 %v161, %v160
    %v186 = vpack.c.b16 %v163, %v162
    %v187 = vpack.c.b16 %v165, %v164
    %v188 = vpack.c.b16 %v167, %v166
    %v189 = vpack.c.b16 %v169, %v168
    %v190 = vpack.c.b16 %v171, %v170
    %v191 = vpack.c.b16 %v173, %v172
    %v192 = vpack.c.b16 %v175, %v174
    %v193 = vpack.c.b16 %v177, %v176
    %210 = vmatprep.subr.bf16.mxu0 0
    %211 = vmatpush1.bf16.msra.mxu0 %v185
    %212 = vmatprep.subr.bf16.mxu0 0
    %213 = vmatpush1.bf16.msra.mxu0 %v184
    %214 = vmatprep.subr.bf16.mxu0 0
    %215 = vmatpush1.bf16.msra.mxu0 %v183
    %216 = vmatprep.subr.bf16.mxu0 0
    %217 = vmatpush1.bf16.msra.mxu0 %v182
    %218 = vmatprep.subr.bf16.mxu0 0
    %219 = vmatpush1.bf16.msra.mxu0 %v181
    %220 = vmatprep.subr.bf16.mxu0 0
    %221 = vmatpush1.bf16.msra.mxu0 %v180
    %222 = vmatprep.subr.bf16.mxu0 0
    %223 = vmatpush1.bf16.msra.mxu0 %v179
    %224 = vmatprep.subr.bf16.mxu0 0
    %225 = vmatpush1.bf16.msra.mxu0 %v178
    %226 = vmatprep.subr.bf16.mxu0 0
    %227 = vmatpush2.bf16.msra.mxu0 %v193
    %228 = vmatprep.subr.bf16.mxu0 0
    %229 = vmatpush2.bf16.msra.mxu0 %v192
    %230 = vmatprep.subr.bf16.mxu0 0
    %231 = vmatpush2.bf16.msra.mxu0 %v191
    %232 = vmatprep.subr.bf16.mxu0 0
    %233 = vmatpush2.bf16.msra.mxu0 %v190
    %234 = vmatprep.subr.bf16.mxu0 0
    %235 = vmatpush2.bf16.msra.mxu0 %v189
    %236 = vmatprep.subr.bf16.mxu0 0
    %237 = vmatpush2.bf16.msra.mxu0 %v188
    %238 = vmatprep.subr.bf16.mxu0 0
    %239 = vmatpush2.bf16.msra.mxu0 %v187
    %240 = vmatprep.subr.bf16.mxu0 0
    %241 = vmatpush2.bf16.msra.mxu0 %v186
    %242 = vmatprep.mubr.bf16.mxu0 %v111
    %243 = vmatmul.mubr.bf16.gmra.mxu0 %v110
    %v244 = vpop.f32.mrf.mxu0
    %v245 = vadd.f32 %v102, %v244
    %v246 = vpop.f32.mrf.mxu0
    %v247 = vpop.f32.mrf.mxu0
    %v248 = vadd.f32 %v102, %v247
    %v249 = vpop.f32.mrf.mxu0
    %250 = vdwg.mxu0
    %v251 = vmax.f32 %v245, 0.0
    %v252 = vmax.f32 %v248, 0.0
    %v253 = vpack.c.bf16 %v252, %v251
    %v254 = vld [vmem:[#allocation7] sm:$0xf]
    %v255 = vld [vmem:[#allocation7 + $0x4] sm:$0xf]
    %v256 = vld [vmem:[#allocation7 + $0x8] sm:$0xf]
    %v257 = vld [vmem:[#allocation7 + $0xc] sm:$0xf]
    %v258 = vld [vmem:[#allocation7 + $0x10] sm:$0xf]
    %v259 = vld [vmem:[#allocation7 + $0x14] sm:$0xf]
    %v260 = vld [vmem:[#allocation7 + $0x18] sm:$0xf]
    %v261 = vld [vmem:[#allocation7 + $0x1c] sm:$0xf]
    %v262 = vld [vmem:[#allocation7 + $0x20] sm:$0xf]
    %v263 = vld [vmem:[#allocation7 + $0x24] sm:$0xf]
    %v264 = vld [vmem:[#allocation7 + $0x28] sm:$0xf]
    %v265 = vld [vmem:[#allocation7 + $0x2c] sm:$0xf]
    %v266 = vld [vmem:[#allocation7 + $0x30] sm:$0xf]
    %v267 = vld [vmem:[#allocation7 + $0x34] sm:$0xf]
    %v268 = vld [vmem:[#allocation7 + $0x38] sm:$0xf]
    %v269 = vld [vmem:[#allocation7 + $0x3c] sm:$0xf]
    %v270 = vld [vmem:[%s4] sm:$0x1]
    %v272 = vlaneseq
    %v273 = vshrl.u32 %v272, 7
    %v274 = vsub.s32 0, %v273
    %v275 = vrot.slane %v270, %v274
    %v293 = vunpack.c.l.b16 %v254
    %v294 = vunpack.c.l.b16 %v255
    %v295 = vunpack.c.l.b16 %v256
    %v296 = vunpack.c.l.b16 %v257
    %v297 = vunpack.c.l.b16 %v258
    %v298 = vunpack.c.l.b16 %v259
    %v299 = vunpack.c.l.b16 %v260
    %v300 = vunpack.c.l.b16 %v261
    %v301 = vunpack.c.l.b16 %v262
    %v302 = vunpack.c.l.b16 %v263
    %v303 = vunpack.c.l.b16 %v264
    %v304 = vunpack.c.l.b16 %v265
    %v305 = vunpack.c.l.b16 %v266
    %v306 = vunpack.c.l.b16 %v267
    %v307 = vunpack.c.l.b16 %v268
    %v308 = vunpack.c.l.b16 %v269
    %v309 = vpack.c.b16 %v294, %v293
    %v310 = vpack.c.b16 %v296, %v295
    %v311 = vpack.c.b16 %v298, %v297
    %v312 = vpack.c.b16 %v300, %v299
    %v313 = vpack.c.b16 %v302, %v301
    %v314 = vpack.c.b16 %v304, %v303
    %v315 = vpack.c.b16 %v306, %v305
    %v316 = vpack.c.b16 %v308, %v307
    %325 = vmatprep.subr.bf16.mxu0 0
    %326 = vmatpush1.bf16.msra.mxu0 %v316
    %327 = vmatprep.subr.bf16.mxu0 0
    %328 = vmatpush1.bf16.msra.mxu0 %v315
    %329 = vmatprep.subr.bf16.mxu0 0
    %330 = vmatpush1.bf16.msra.mxu0 %v314
    %331 = vmatprep.subr.bf16.mxu0 0
    %332 = vmatpush1.bf16.msra.mxu0 %v313
    %333 = vmatprep.subr.bf16.mxu0 0
    %334 = vmatpush1.bf16.msra.mxu0 %v312
    %335 = vmatprep.subr.bf16.mxu0 0
    %336 = vmatpush1.bf16.msra.mxu0 %v311
    %337 = vmatprep.subr.bf16.mxu0 0
    %338 = vmatpush1.bf16.msra.mxu0 %v310
    %339 = vmatprep.subr.bf16.mxu0 0
    %340 = vmatpush1.bf16.msra.mxu0 %v309
    %341 = vmatprep.subr.bf16.mxu0 0
    %342 = vmatpush2.bf16.msra.mxu0 0
    %343 = vmatprep.subr.bf16.mxu0 0
    %344 = vmatpush2.bf16.msra.mxu0 0
    %345 = vmatprep.subr.bf16.mxu0 0
    %346 = vmatpush2.bf16.msra.mxu0 0
    %347 = vmatprep.subr.bf16.mxu0 0
    %348 = vmatpush2.bf16.msra.mxu0 0
    %349 = vmatprep.subr.bf16.mxu0 0
    %350 = vmatpush2.bf16.msra.mxu0 0
    %351 = vmatprep.subr.bf16.mxu0 0
    %352 = vmatpush2.bf16.msra.mxu0 0
    %353 = vmatprep.subr.bf16.mxu0 0
    %354 = vmatpush2.bf16.msra.mxu0 0
    %355 = vmatprep.subr.bf16.mxu0 0
    %356 = vmatpush2.bf16.msra.mxu0 0
    %357 = vmatprep.mubr.bf16.mxu0 0
    %358 = vmatmul.mubr.bf16.gmra.mxu0 %v253
    %v359 = vpop.f32.mrf.mxu0
    %v360 = vadd.f32 %v275, %v359
    %v361 = vpop.f32.mrf.mxu0
    %v362 = vpop.f32.mrf.mxu0
    %v363 = vadd.f32 %v275, %v362
    %v364 = vpop.f32.mrf.mxu0
    %365 = vdwg.mxu0
    %366 = vst [vmem:[#allocation8] sm:$0xff] %v360
    %367 = vst [vmem:[#allocation8 + $0x8] sm:$0xff] %v363
    // Predicated region
    $region34: #{tpu_custom_call.1} parent=1 // pred_check
      _
    $region35: #{tpu_custom_call.1} parent=1 // pred_check_branch
      %369 = sbr.rel (0) target = $region37
    $region36: #{tpu_custom_call.1} parent=1 // pred_region
      %s371 = ssub.s32 256, 256
      %372 = vsyncadd [#allocation4], %s371
      %s373 = sshll.u32 [#allocation8], 4
      %s374 = int_to_ptr.vmem [resolvable:$true] %s373
      %379 = dma.vmem_to_hbm [thread:$0]  %s374, 256, %s5, [#allocation4], 128, 128, 8
    $region37: #{tpu_custom_call.1} parent=1 // pred_fallthru
      _
    // Predicated region
    $region38: #{tpu_custom_call.1} parent=1 // pred_check
      _
    $region39: #{tpu_custom_call.1} parent=1 // pred_check_branch
      %381 = sbr.rel (0) target = $region41
    $region40: #{tpu_custom_call.1} parent=1 // pred_region
      %382 = dma.done [#allocation4], 256
    $region41: #{tpu_custom_call.1} parent=1 // pred_fallthru
      _
    %383 = vsyncpa [#allocation3], 1
    %384 = vsyncpa [#allocation6], 1
    %385 = vsyncpa [#allocation4], 1

</llo_original>
